<compile_context>
chip_gen: v7x
topology: tpu7x:2x2x1
jax: 0.10.0
libtpu: 0.0.40
codegen_flags: <defaults>
</compile_context>

<pallas_src>
import functools

import jax
import jax.numpy as jnp
from jax.experimental import pallas as pl
from jax.experimental.pallas import tpu as pltpu


def _round_up(x, m):
    return ((x + m - 1) // m) * m


def _vmem_cap_bytes():
    """Hardware-aware VMEM cap with headroom (<=48 MiB v7x, <=96 MiB v5e/v6e)."""
    try:
        cap = int(pltpu.get_tpu_info().vmem_capacity_bytes)
    except Exception:  # pragma: no cover - conservative default
        cap = 64 << 20
    return max(16 << 20, min(cap - (16 << 20), 96 << 20))


# ----------------------------------------------------------------------------
# Fused path: all (padded, bf16) weights resident in VMEM, batch streamed.
# ----------------------------------------------------------------------------
def _fused_mlp_kernel(n_layers, x_ref, *refs):
    """refs = (w0, b0, w1, b1, ..., out_ref). Weights bf16, biases f32."""
    out_ref = refs[-1]
    params = refs[:-1]

    h = x_ref[...]                                   # (tb, d_in) bf16
    for layer in range(n_layers):
        w = params[2 * layer][...]                   # (in, out_pad) bf16
        b = params[2 * layer + 1][...]               # (1, out_pad) f32
        acc = jnp.dot(h, w, preferred_element_type=jnp.float32) + b
        if layer < n_layers - 1:                     # activ='relu' except last
            acc = jnp.maximum(acc, 0.0)
        h = acc.astype(jnp.bfloat16)                 # single f32->bf16 pack/layer
    out_ref[...] = h                                 # lane-dense bf16 store


# ----------------------------------------------------------------------------
# Streamed fallback: one tiled matmul+bias(+relu) pallas_call per layer.
# Used when the resident-weight design would not fit the VMEM cap (v7x guard).
# ----------------------------------------------------------------------------
def _linear_kernel(relu, x_ref, w_ref, b_ref, o_ref, acc_ref):
    k = pl.program_id(2)

    @pl.when(k == 0)
    def _():
        acc_ref[...] = jnp.zeros_like(acc_ref)

    acc_ref[...] += jnp.dot(x_ref[...], w_ref[...],
                            preferred_element_type=jnp.float32)

    @pl.when(k == pl.num_programs(2) - 1)
    def _():
        h = acc_ref[...] + b_ref[...]
        if relu:
            h = jnp.maximum(h, 0.0)
        o_ref[...] = h.astype(o_ref.dtype)


def _linear_streamed(h, w, b, *, relu, tm, vmem_cap, tn=256, tk=512):
    """h: (M, K) bf16 with M % tm == 0. Returns (M, Np) bf16."""
    M, K = h.shape
    N = w.shape[1]

    tn = min(tn, _round_up(N, 128))
    Np = _round_up(N, tn)
    tk = min(tk, _round_up(K, 128))
    Kp = _round_up(K, tk)

    h_p = h if K == Kp else jnp.pad(h, ((0, 0), (0, Kp - K)))
    w_p = jnp.zeros((Kp, Np), jnp.bfloat16)
    w_p = w_p.at[:w.shape[0], :N].set(w.astype(jnp.bfloat16))
    b_p = jnp.zeros((1, Np), jnp.float32).at[0, :N].set(b.astype(jnp.float32))

    grid = (M // tm, Np // tn, Kp // tk)
    return pl.pallas_call(
        functools.partial(_linear_kernel, relu),
        out_shape=jax.ShapeDtypeStruct((M, Np), jnp.bfloat16),
        grid=grid,
        in_specs=[pl.BlockSpec((tm, tk), lambda i, j, k: (i, k)),
                  pl.BlockSpec((tk, tn), lambda i, j, k: (k, j)),
                  pl.BlockSpec((1, tn), lambda i, j, k: (0, j))],
        out_specs=pl.BlockSpec((tm, tn), lambda i, j, k: (i, j)),
        scratch_shapes=[pltpu.VMEM((tm, tn), jnp.float32)],
        compiler_params=pltpu.CompilerParams(
            dimension_semantics=("parallel", "parallel", "arbitrary"),
            vmem_limit_bytes=int(min(vmem_cap, 48 << 20))),
        cost_estimate=pl.CostEstimate(
            flops=2 * M * Kp * Np, transcendentals=0,
            bytes_accessed=M * Kp * 2 + Kp * Np * 2 + Np * 4 + M * Np * 2),
    )(h_p, w_p, b_p)


def _mlp_streamed(x_p, weights, biases, B, out_dim, out_dtype, tm, cap):
    n = len(weights)
    h = x_p                                          # (b_pad, d_in) bf16
    for i, (w, b) in enumerate(zip(weights, biases)):
        h = _linear_streamed(h, w, b, relu=(i < n - 1), tm=tm, vmem_cap=cap)
    return h[:B, :out_dim].astype(out_dtype)


# ----------------------------------------------------------------------------
# Public forward.
# ----------------------------------------------------------------------------
def mlp_forward(x, weights, biases, *, batch_tile=1024, force_streamed=False):
    """x: [B, C, H, W] (or already flat [B, D]). weights[i]: (in_i, out_i)."""
    if not jnp.issubdtype(x.dtype, jnp.floating):
        raise TypeError(f"MLP expects a floating-point input, got {x.dtype}")

    B = x.shape[0]
    x2d = x.reshape(B, -1)                           # x.view(x.size(0), -1)
    d_in = x2d.shape[1]
    n_layers = len(weights)
    out_dim = weights[-1].shape[1]
    out_dtype = x.dtype

    # Lane-dense padding for every *output* feature dim only (multiple of 128).
    # d_in is streamed unpadded: a (tb, d_in) block is legal since d_in is the
    # full array dim; Mosaic handles the small-K matmul internally.
    out_pads = [_round_up(w.shape[1], 128) for w in weights]
    in_dims = [d_in] + out_pads[:-1]
    out_pad = out_pads[-1]

    # Batch tile: large (amortizes per-step overhead, ~85% of HBM roofline at
    # 512-1024), but keep >=2 grid steps when B allows so both v7x TCs work.
    tb = max(8, min(batch_tile, _round_up(pl.cdiv(B, 2), 8)))
    b_pad = _round_up(B, tb)
    grid = (b_pad // tb,)

    # bf16 input stream, zero-padded rows only.
    x_p = jnp.zeros((b_pad, d_in), jnp.bfloat16)
    x_p = x_p.at[:B].set(x2d.astype(jnp.bfloat16))

    # Pad parameters: weights bf16 (MXU-native), biases f32.
    w_ps, b_ps = [], []
    for w, b, ip, op in zip(weights, biases, in_dims, out_pads):
        w_p = jnp.zeros((ip, op), jnp.bfloat16)
        w_p = w_p.at[:w.shape[0], :w.shape[1]].set(w.astype(jnp.bfloat16))
        b_p = jnp.zeros((1, op), jnp.float32)
        b_p = b_p.at[0, :b.shape[0]].set(b.astype(jnp.float32))
        w_ps.append(w_p)
        b_ps.append(b_p)

    # VMEM budget: params single-buffered (Buffered(1)), x/out double-buffered
    # bf16 tiles, plus the largest f32+bf16 intermediate and Mosaic headroom.
    param_bytes = sum(int(a.size) * a.dtype.itemsize for a in (*w_ps, *b_ps))
    io_bytes = 2 * (tb * d_in * 2 + tb * out_pad * 2)
    h_bytes = tb * max(out_pads) * (4 + 2)
    need = param_bytes + io_bytes + h_bytes + (4 << 20)
    cap = _vmem_cap_bytes()

    if force_streamed or need > cap:
        # Resident-weight design does not fit (matters on v7x's 64 MiB VMEM):
        # stream weights per layer instead of keeping them all resident.
        return _mlp_streamed(x_p, weights, biases, B, out_dim, out_dtype, tb, cap)

    vmem_limit = int(min(max(need, 16 << 20), cap))
    flops = 2 * b_pad * sum(ip * op for ip, op in zip(in_dims, out_pads))
    bytes_accessed = int(x_p.size) * 2 + param_bytes + b_pad * out_pad * 2

    flat_params = []
    for w_p, b_p in zip(w_ps, b_ps):
        flat_params += [w_p, b_p]

    def run(single_buffer_params):
        def const_spec(shape):
            if single_buffer_params:
                return pl.BlockSpec(shape, lambda i: (0, 0),
                                    pipeline_mode=pl.Buffered(1))
            return pl.BlockSpec(shape, lambda i: (0, 0))

        in_specs = [pl.BlockSpec((tb, d_in), lambda i: (i, 0))]
        for w_p, b_p in zip(w_ps, b_ps):
            in_specs += [const_spec(w_p.shape), const_spec(b_p.shape)]

        return pl.pallas_call(
            functools.partial(_fused_mlp_kernel, n_layers),
            out_shape=jax.ShapeDtypeStruct((b_pad, out_pad), jnp.bfloat16),
            grid=grid,
            in_specs=in_specs,
            out_specs=pl.BlockSpec((tb, out_pad), lambda i: (i, 0)),
            compiler_params=pltpu.CompilerParams(
                dimension_semantics=("parallel",),   # megacore on v7x
                vmem_limit_bytes=vmem_limit),
            cost_estimate=pl.CostEstimate(
                flops=flops, transcendentals=0, bytes_accessed=bytes_accessed),
        )(x_p, *flat_params)

    try:
        out = run(True)
    except Exception:
        # Compatibility retry if pipeline_mode=pl.Buffered(1) is unsupported.
        out = run(False)

    # Strip batch / feature padding; cast back to the caller's dtype.
    return out[:B, :out_dim].astype(out_dtype)


# ----------------------------------------------------------------------------
# Test scaffolding.
# ----------------------------------------------------------------------------
def init_mlp_params(key, input_dim, output_dim, dim, n_blk, dtype=jnp.float32):
    """Deterministic init matching the layer shapes of MLP.__init__."""
    dims = [input_dim] + [dim] * (n_blk - 1) + [output_dim]
    weights, biases = [], []
    for i in range(n_blk):
        key, wk, bk = jax.random.split(key, 3)
        bound = 1.0 / (dims[i] ** 0.5)               # nn.Linear default scale
        w = jax.random.uniform(wk, (dims[i], dims[i + 1]), dtype,
                               minval=-bound, maxval=bound)
        b = jax.random.uniform(bk, (dims[i + 1],), dtype,
                               minval=-bound, maxval=bound)
        weights.append(w)
        biases.append(b)
    return weights, biases


def mlp_reference(x, weights, biases):
    h = x.reshape(x.shape[0], -1).astype(jnp.float32)
    n = len(weights)
    for i, (w, b) in enumerate(zip(weights, biases)):
        h = h @ w + b
        if i < n - 1:
            h = jnp.maximum(h, 0.0)
    return h.astype(x.dtype)


if __name__ == "__main__":
    # MLP(input_dim=32, output_dim=16, dim=64, n_blk=3, norm='none', activ='relu')
    B, C, H, W = 2, 8, 2, 2                          # flattened input_dim = 32
    input_dim = C * H * W
    output_dim, dim, n_blk = 16, 64, 3

    key = jax.random.PRNGKey(0)
    key, xk = jax.random.split(key)
    x = jax.random.normal(xk, (B, C, H, W), jnp.float32)
    weights, biases = init_mlp_params(key, input_dim, output_dim, dim, n_blk)

    out = jax.block_until_ready(mlp_forward(x, weights, biases))
    ref = mlp_reference(x, weights, biases)
    assert out.shape == (B, output_dim)
    assert jnp.allclose(out, ref, atol=5e-2, rtol=5e-2)

    # Multi-tile batch grid (>=2 steps) exercising the pipelined fused path.
    key, xk2 = jax.random.split(key)
    B2 = 48
    x2 = jax.random.normal(xk2, (B2, C, H, W), jnp.float32)
    out2 = jax.block_until_ready(mlp_forward(x2, weights, biases, batch_tile=16))
    ref2 = mlp_reference(x2, weights, biases)
    assert out2.shape == (B2, output_dim)
    assert jnp.allclose(out2, ref2, atol=5e-2, rtol=5e-2)

    # Streamed-weights fallback (VMEM guard path for large models on v7x).
    out3 = jax.block_until_ready(
        mlp_forward(x2, weights, biases, batch_tile=16, force_streamed=True))
    assert out3.shape == (B2, output_dim)
    assert jnp.allclose(out3, ref2, atol=5e-2, rtol=5e-2)

    print("KERNEL_OK")
</pallas_src>

<mosaic_0001>
module attributes {stable_mosaic.version = 11 : i64} {
  func.func @_fused_mlp_kernel(%arg0: i32, %arg1: memref<8x32xbf16, #tpu.memory_space<vmem>>, %arg2: memref<32x128xbf16, #tpu.memory_space<vmem>>, %arg3: memref<1x128xf32, #tpu.memory_space<vmem>>, %arg4: memref<128x128xbf16, #tpu.memory_space<vmem>>, %arg5: memref<1x128xf32, #tpu.memory_space<vmem>>, %arg6: memref<128x128xbf16, #tpu.memory_space<vmem>>, %arg7: memref<1x128xf32, #tpu.memory_space<vmem>>, %arg8: memref<8x128xbf16, #tpu.memory_space<vmem>>) attributes {dimension_semantics = [#tpu.dimension_semantics<parallel>], iteration_bounds = array<i64: 1>, scalar_prefetch = 0 : i64, scratch_operands = 0 : i64, tpu.core_type = #tpu.core_type<tc>, window_params = [{transform_indices = @transform_0, window_bounds = array<i64: 8, 32>}, {pipeline_mode = #tpu.pipeline_mode<synchronous>, transform_indices = @transform_1, window_bounds = array<i64: 32, 128>}, {pipeline_mode = #tpu.pipeline_mode<synchronous>, transform_indices = @transform_2, window_bounds = array<i64: 1, 128>}, {pipeline_mode = #tpu.pipeline_mode<synchronous>, transform_indices = @transform_3, window_bounds = array<i64: 128, 128>}, {pipeline_mode = #tpu.pipeline_mode<synchronous>, transform_indices = @transform_4, window_bounds = array<i64: 1, 128>}, {pipeline_mode = #tpu.pipeline_mode<synchronous>, transform_indices = @transform_5, window_bounds = array<i64: 128, 128>}, {pipeline_mode = #tpu.pipeline_mode<synchronous>, transform_indices = @transform_6, window_bounds = array<i64: 1, 128>}, {transform_indices = @transform_7, window_bounds = array<i64: 8, 128>}]} {
    %c0 = arith.constant 0 : index
    %c0_0 = arith.constant 0 : index
    %0 = vector.load %arg1[%c0, %c0_0] : memref<8x32xbf16, #tpu.memory_space<vmem>>, vector<8x32xbf16>
    %c0_1 = arith.constant 0 : index
    %c0_2 = arith.constant 0 : index
    %1 = vector.load %arg2[%c0_1, %c0_2] : memref<32x128xbf16, #tpu.memory_space<vmem>>, vector<32x128xbf16>
    %c0_3 = arith.constant 0 : index
    %c0_4 = arith.constant 0 : index
    %2 = vector.load %arg3[%c0_3, %c0_4] : memref<1x128xf32, #tpu.memory_space<vmem>>, vector<1x128xf32>
    %cst = arith.constant dense<0.000000e+00> : vector<8x128xf32>
    %3 = tpu.matmul %0, %1, %cst {dimension_numbers = #tpu.dot_dimension_numbers<[1], [0], [0], [1], [0, 0, 1, 1], [], []>} : vector<8x32xbf16>, vector<32x128xbf16>, vector<8x128xf32> -> vector<8x128xf32>
    %4 = vector.broadcast %2 : vector<1x128xf32> to vector<8x128xf32>
    %5 = arith.addf %3, %4 : vector<8x128xf32>
    %cst_5 = arith.constant 0.000000e+00 : f32
    %6 = vector.broadcast %cst_5 : f32 to vector<8x128xf32>
    %7 = arith.maximumf %5, %6 : vector<8x128xf32>
    %8 = arith.truncf %7 : vector<8x128xf32> to vector<8x128xbf16>
    %c0_6 = arith.constant 0 : index
    %c0_7 = arith.constant 0 : index
    %9 = vector.load %arg4[%c0_6, %c0_7] : memref<128x128xbf16, #tpu.memory_space<vmem>>, vector<128x128xbf16>
    %c0_8 = arith.constant 0 : index
    %c0_9 = arith.constant 0 : index
    %10 = vector.load %arg5[%c0_8, %c0_9] : memref<1x128xf32, #tpu.memory_space<vmem>>, vector<1x128xf32>
    %cst_10 = arith.constant dense<0.000000e+00> : vector<8x128xf32>
    %11 = tpu.matmul %8, %9, %cst_10 {dimension_numbers = #tpu.dot_dimension_numbers<[1], [0], [0], [1], [0, 0, 1, 1], [], []>} : vector<8x128xbf16>, vector<128x128xbf16>, vector<8x128xf32> -> vector<8x128xf32>
    %12 = vector.broadcast %10 : vector<1x128xf32> to vector<8x128xf32>
    %13 = arith.addf %11, %12 : vector<8x128xf32>
    %cst_11 = arith.constant 0.000000e+00 : f32
    %14 = vector.broadcast %cst_11 : f32 to vector<8x128xf32>
    %15 = arith.maximumf %13, %14 : vector<8x128xf32>
    %16 = arith.truncf %15 : vector<8x128xf32> to vector<8x128xbf16>
    %c0_12 = arith.constant 0 : index
    %c0_13 = arith.constant 0 : index
    %17 = vector.load %arg6[%c0_12, %c0_13] : memref<128x128xbf16, #tpu.memory_space<vmem>>, vector<128x128xbf16>
    %c0_14 = arith.constant 0 : index
    %c0_15 = arith.constant 0 : index
    %18 = vector.load %arg7[%c0_14, %c0_15] : memref<1x128xf32, #tpu.memory_space<vmem>>, vector<1x128xf32>
    %cst_16 = arith.constant dense<0.000000e+00> : vector<8x128xf32>
    %19 = tpu.matmul %16, %17, %cst_16 {dimension_numbers = #tpu.dot_dimension_numbers<[1], [0], [0], [1], [0, 0, 1, 1], [], []>} : vector<8x128xbf16>, vector<128x128xbf16>, vector<8x128xf32> -> vector<8x128xf32>
    %20 = vector.broadcast %18 : vector<1x128xf32> to vector<8x128xf32>
    %21 = arith.addf %19, %20 : vector<8x128xf32>
    %22 = arith.truncf %21 : vector<8x128xf32> to vector<8x128xbf16>
    %c0_17 = arith.constant 0 : index
    %c0_18 = arith.constant 0 : index
    %23 = vector.load %arg8[%c0_17, %c0_18] : memref<8x128xbf16, #tpu.memory_space<vmem>>, vector<8x128xbf16>
    tpu.vector_store %arg8[%c0_17, %c0_18], %22 {strides = array<i32>} : memref<8x128xbf16, #tpu.memory_space<vmem>>, vector<8x128xbf16>,
    return
  }
  func.func @transform_0(%arg0: i32) -> (i32, i32) {
    %c0_i32 = arith.constant 0 : i32
    %c0_i32_0 = arith.constant 0 : i32
    return %arg0, %c0_i32 : i32, i32
  }
  func.func @transform_1(%arg0: i32) -> (i32, i32) {
    %c0_i32 = arith.constant 0 : i32
    %c0_i32_0 = arith.constant 0 : i32
    %c0_i32_1 = arith.constant 0 : i32
    return %c0_i32, %c0_i32_0 : i32, i32
  }
  func.func @transform_2(%arg0: i32) -> (i32, i32) {
    %c0_i32 = arith.constant 0 : i32
    %c0_i32_0 = arith.constant 0 : i32
    %c0_i32_1 = arith.constant 0 : i32
    return %c0_i32, %c0_i32_0 : i32, i32
  }
  func.func @transform_3(%arg0: i32) -> (i32, i32) {
    %c0_i32 = arith.constant 0 : i32
    %c0_i32_0 = arith.constant 0 : i32
    %c0_i32_1 = arith.constant 0 : i32
    return %c0_i32, %c0_i32_0 : i32, i32
  }
  func.func @transform_4(%arg0: i32) -> (i32, i32) {
    %c0_i32 = arith.constant 0 : i32
    %c0_i32_0 = arith.constant 0 : i32
    %c0_i32_1 = arith.constant 0 : i32
    return %c0_i32, %c0_i32_0 : i32, i32
  }
  func.func @transform_5(%arg0: i32) -> (i32, i32) {
    %c0_i32 = arith.constant 0 : i32
    %c0_i32_0 = arith.constant 0 : i32
    %c0_i32_1 = arith.constant 0 : i32
    return %c0_i32, %c0_i32_0 : i32, i32
  }
  func.func @transform_6(%arg0: i32) -> (i32, i32) {
    %c0_i32 = arith.constant 0 : i32
    %c0_i32_0 = arith.constant 0 : i32
    %c0_i32_1 = arith.constant 0 : i32
    return %c0_i32, %c0_i32_0 : i32, i32
  }
  func.func @transform_7(%arg0: i32) -> (i32, i32) {
    %c0_i32 = arith.constant 0 : i32
    %c0_i32_0 = arith.constant 0 : i32
    return %arg0, %c0_i32 : i32, i32
  }
}

module attributes {stable_mosaic.version = 11 : i64} {
  func.func @_fused_mlp_kernel(%arg0: i32, %arg1: memref<8x32xbf16, #tpu.memory_space<vmem>>, %arg2: memref<32x128xbf16, #tpu.memory_space<vmem>>, %arg3: memref<1x128xf32, #tpu.memory_space<vmem>>, %arg4: memref<128x128xbf16, #tpu.memory_space<vmem>>, %arg5: memref<1x128xf32, #tpu.memory_space<vmem>>, %arg6: memref<128x128xbf16, #tpu.memory_space<vmem>>, %arg7: memref<1x128xf32, #tpu.memory_space<vmem>>, %arg8: memref<8x128xbf16, #tpu.memory_space<vmem>>) attributes {dimension_semantics = [#tpu.dimension_semantics<parallel>], iteration_bounds = array<i64: 1>, scalar_prefetch = 0 : i64, scratch_operands = 0 : i64, tpu.core_type = #tpu.core_type<tc>, window_params = [{transform_indices = @transform_0, window_bounds = array<i64: 8, 32>}, {pipeline_mode = #tpu.pipeline_mode<synchronous>, transform_indices = @transform_1, window_bounds = array<i64: 32, 128>}, {pipeline_mode = #tpu.pipeline_mode<synchronous>, transform_indices = @transform_2, window_bounds = array<i64: 1, 128>}, {pipeline_mode = #tpu.pipeline_mode<synchronous>, transform_indices = @transform_3, window_bounds = array<i64: 128, 128>}, {pipeline_mode = #tpu.pipeline_mode<synchronous>, transform_indices = @transform_4, window_bounds = array<i64: 1, 128>}, {pipeline_mode = #tpu.pipeline_mode<synchronous>, transform_indices = @transform_5, window_bounds = array<i64: 128, 128>}, {pipeline_mode = #tpu.pipeline_mode<synchronous>, transform_indices = @transform_6, window_bounds = array<i64: 1, 128>}, {transform_indices = @transform_7, window_bounds = array<i64: 8, 128>}]} {
    %c0 = arith.constant 0 : index
    %c0_0 = arith.constant 0 : index
    %0 = vector.load %arg1[%c0, %c0_0] : memref<8x32xbf16, #tpu.memory_space<vmem>>, vector<8x32xbf16>
    %c0_1 = arith.constant 0 : index
    %c0_2 = arith.constant 0 : index
    %1 = vector.load %arg2[%c0_1, %c0_2] : memref<32x128xbf16, #tpu.memory_space<vmem>>, vector<32x128xbf16>
    %c0_3 = arith.constant 0 : index
    %c0_4 = arith.constant 0 : index
    %2 = vector.load %arg3[%c0_3, %c0_4] : memref<1x128xf32, #tpu.memory_space<vmem>>, vector<1x128xf32>
    %cst = arith.constant dense<0.000000e+00> : vector<8x128xf32>
    %3 = tpu.matmul %0, %1, %cst {dimension_numbers = #tpu.dot_dimension_numbers<[1], [0], [0], [1], [0, 0, 1, 1], [], []>} : vector<8x32xbf16>, vector<32x128xbf16>, vector<8x128xf32> -> vector<8x128xf32>
    %4 = vector.broadcast %2 : vector<1x128xf32> to vector<8x128xf32>
    %5 = arith.addf %3, %4 : vector<8x128xf32>
    %cst_5 = arith.constant 0.000000e+00 : f32
    %6 = vector.broadcast %cst_5 : f32 to vector<8x128xf32>
    %7 = arith.maximumf %5, %6 : vector<8x128xf32>
    %8 = arith.truncf %7 : vector<8x128xf32> to vector<8x128xbf16>
    %c0_6 = arith.constant 0 : index
    %c0_7 = arith.constant 0 : index
    %9 = vector.load %arg4[%c0_6, %c0_7] : memref<128x128xbf16, #tpu.memory_space<vmem>>, vector<128x128xbf16>
    %c0_8 = arith.constant 0 : index
    %c0_9 = arith.constant 0 : index
    %10 = vector.load %arg5[%c0_8, %c0_9] : memref<1x128xf32, #tpu.memory_space<vmem>>, vector<1x128xf32>
    %cst_10 = arith.constant dense<0.000000e+00> : vector<8x128xf32>
    %11 = tpu.matmul %8, %9, %cst_10 {dimension_numbers = #tpu.dot_dimension_numbers<[1], [0], [0], [1], [0, 0, 1, 1], [], []>} : vector<8x128xbf16>, vector<128x128xbf16>, vector<8x128xf32> -> vector<8x128xf32>
    %12 = vector.broadcast %10 : vector<1x128xf32> to vector<8x128xf32>
    %13 = arith.addf %11, %12 : vector<8x128xf32>
    %cst_11 = arith.constant 0.000000e+00 : f32
    %14 = vector.broadcast %cst_11 : f32 to vector<8x128xf32>
    %15 = arith.maximumf %13, %14 : vector<8x128xf32>
    %16 = arith.truncf %15 : vector<8x128xf32> to vector<8x128xbf16>
    %c0_12 = arith.constant 0 : index
    %c0_13 = arith.constant 0 : index
    %17 = vector.load %arg6[%c0_12, %c0_13] : memref<128x128xbf16, #tpu.memory_space<vmem>>, vector<128x128xbf16>
    %c0_14 = arith.constant 0 : index
    %c0_15 = arith.constant 0 : index
    %18 = vector.load %arg7[%c0_14, %c0_15] : memref<1x128xf32, #tpu.memory_space<vmem>>, vector<1x128xf32>
    %cst_16 = arith.constant dense<0.000000e+00> : vector<8x128xf32>
    %19 = tpu.matmul %16, %17, %cst_16 {dimension_numbers = #tpu.dot_dimension_numbers<[1], [0], [0], [1], [0, 0, 1, 1], [], []>} : vector<8x128xbf16>, vector<128x128xbf16>, vector<8x128xf32> -> vector<8x128xf32>
    %20 = vector.broadcast %18 : vector<1x128xf32> to vector<8x128xf32>
    %21 = arith.addf %19, %20 : vector<8x128xf32>
    %22 = arith.truncf %21 : vector<8x128xf32> to vector<8x128xbf16>
    %c0_17 = arith.constant 0 : index
    %c0_18 = arith.constant 0 : index
    %23 = vector.load %arg8[%c0_17, %c0_18] : memref<8x128xbf16, #tpu.memory_space<vmem>>, vector<8x128xbf16>
    tpu.vector_store %arg8[%c0_17, %c0_18], %22 {strides = array<i32>} : memref<8x128xbf16, #tpu.memory_space<vmem>>, vector<8x128xbf16>,
    return
  }
  func.func @transform_0(%arg0: i32) -> (i32, i32) {
    %c0_i32 = arith.constant 0 : i32
    %c0_i32_0 = arith.constant 0 : i32
    return %arg0, %c0_i32 : i32, i32
  }
  func.func @transform_1(%arg0: i32) -> (i32, i32) {
    %c0_i32 = arith.constant 0 : i32
    %c0_i32_0 = arith.constant 0 : i32
    %c0_i32_1 = arith.constant 0 : i32
    return %c0_i32, %c0_i32_0 : i32, i32
  }
  func.func @transform_2(%arg0: i32) -> (i32, i32) {
    %c0_i32 = arith.constant 0 : i32
    %c0_i32_0 = arith.constant 0 : i32
    %c0_i32_1 = arith.constant 0 : i32
    return %c0_i32, %c0_i32_0 : i32, i32
  }
  func.func @transform_3(%arg0: i32) -> (i32, i32) {
    %c0_i32 = arith.constant 0 : i32
    %c0_i32_0 = arith.constant 0 : i32
    %c0_i32_1 = arith.constant 0 : i32
    return %c0_i32, %c0_i32_0 : i32, i32
  }
  func.func @transform_4(%arg0: i32) -> (i32, i32) {
    %c0_i32 = arith.constant 0 : i32
    %c0_i32_0 = arith.constant 0 : i32
    %c0_i32_1 = arith.constant 0 : i32
    return %c0_i32, %c0_i32_0 : i32, i32
  }
  func.func @transform_5(%arg0: i32) -> (i32, i32) {
    %c0_i32 = arith.constant 0 : i32
    %c0_i32_0 = arith.constant 0 : i32
    %c0_i32_1 = arith.constant 0 : i32
    return %c0_i32, %c0_i32_0 : i32, i32
  }
  func.func @transform_6(%arg0: i32) -> (i32, i32) {
    %c0_i32 = arith.constant 0 : i32
    %c0_i32_0 = arith.constant 0 : i32
    %c0_i32_1 = arith.constant 0 : i32
    return %c0_i32, %c0_i32_0 : i32, i32
  }
  func.func @transform_7(%arg0: i32) -> (i32, i32) {
    %c0_i32 = arith.constant 0 : i32
    %c0_i32_0 = arith.constant 0 : i32
    return %arg0, %c0_i32 : i32, i32
  }
}

</mosaic_0001>

<llo_original>
// kernel: tpu_custom_call.1
$region0: #{tpu_custom_call.1}
  #allocation0 [shape = 'u32[]', space=smem, size = 0x4, offset = 0x4, fixed_abs, tag = 'smem constant byte address 0x4 - core index']
  #allocation1 [shape = 'u32[144,128]{1,0:T(1,128)}', space=vmem, size = 0x12000, scoped, tag = 'internal scratch']
  %s0 = inlined_call_operand.hbm [shape: bf16[8,32], index: 0, kind: input, shape index: {}]
  %s1 = inlined_call_operand.hbm [shape: bf16[32,128], index: 1, kind: input, shape index: {}]
  %s2 = inlined_call_operand.vmem [shape: f32[1,128], index: 2, kind: input, shape index: {}]
  %s3 = inlined_call_operand.hbm [shape: bf16[128,128], index: 3, kind: input, shape index: {}]
  %s4 = inlined_call_operand.vmem [shape: f32[1,128], index: 4, kind: input, shape index: {}]
  %s5 = inlined_call_operand.hbm [shape: bf16[128,128], index: 5, kind: input, shape index: {}]
  %s6 = inlined_call_operand.vmem [shape: f32[1,128], index: 6, kind: input, shape index: {}]
  %s7 = inlined_call_operand.hbm [shape: bf16[8,128], index: 7, kind: output, shape index: {}]
  %s8 = sld [smem:[#allocation0]]
  $region54: #{tpu_custom_call.1} parent=0
    _
  %s10 = ssub.s32 1, %s8
  %s11 = scalar_select 0, %s10, %s8
  $region1: #{tpu_custom_call.1} parent=0
    #allocation2 [shape = 'u8[2048]{0}', space=vmem, size = 0x800, scoped, tag = 'input window, operand 0, single buffered']
    #allocation3 [shape = 's32[1]{0}', space=sflag, size = 0x4, scoped, tag = 'scoped memory for tpu_custom_call.1']
    #allocation4 [shape = 's32[1]{0}', space=sflag, size = 0x4, scoped, tag = 'scoped memory for tpu_custom_call.1']
    #allocation5 [shape = 'u8[8192]{0}', space=vmem, size = 0x2000, scoped, tag = 'input window, operand 1, single buffered']
    #allocation6 [shape = 's32[1]{0}', space=sflag, size = 0x4, scoped, tag = 'scoped memory for tpu_custom_call.1']
    #allocation7 [shape = 'u8[32768]{0}', space=vmem, size = 0x8000, scoped, tag = 'input window, operand 3, single buffered']
    #allocation8 [shape = 'u8[32768]{0}', space=vmem, size = 0x8000, scoped, tag = 'input window, operand 5, single buffered']
    #allocation9 [shape = 's32[1]{0}', space=sflag, size = 0x4, scoped, tag = 'scoped memory for tpu_custom_call.1']
    #allocation10 [shape = 'u8[2048]{0}', space=vmem, size = 0x800, scoped, tag = 'output window, operand 0, single buffered']
    %12 = vsyncpa [#allocation3], 0
    %13 = vsyncpa [#allocation6], 0
    %14 = vsyncpa [#allocation9], 0
    %15 = vsyncpa [#allocation4], 0
    // Predicated region
    $region2: #{tpu_custom_call.1} parent=1 // pred_check
      _
    $region3: #{tpu_custom_call.1} parent=1 // pred_check_branch
      %17 = sbr.rel (0) target = $region5
    $region4: #{tpu_custom_call.1} parent=1 // pred_region
      %s19 = ssub.s32 64, 64
      %20 = vsyncadd [#allocation3], %s19
      %s22 = sshll.u32 [#allocation2], 4
      %s23 = int_to_ptr.vmem [resolvable:$true] %s22
      %25 = dma.hbm_to_vmem [thread:$0]  %s0, 64, %s23, [#allocation3]
    $region5: #{tpu_custom_call.1} parent=1 // pred_fallthru
      _
    // Predicated region
    $region6: #{tpu_custom_call.1} parent=1 // pred_check
      _
    $region7: #{tpu_custom_call.1} parent=1 // pred_check_branch
      %27 = sbr.rel (0) target = $region9
    $region8: #{tpu_custom_call.1} parent=1 // pred_region
      %s29 = ssub.s32 256, 256
      %30 = vsyncadd [#allocation6], %s29
      %s31 = sshll.u32 [#allocation5], 4
      %s32 = int_to_ptr.vmem [resolvable:$true] %s31
      %37 = dma.hbm_to_vmem [thread:$0]  %s1, 256, %s32, [#allocation6], 64, 64, 4
    $region9: #{tpu_custom_call.1} parent=1 // pred_fallthru
      _
    // Predicated region
    $region10: #{tpu_custom_call.1} parent=1 // pred_check
      _
    $region11: #{tpu_custom_call.1} parent=1 // pred_check_branch
      %39 = sbr.rel (0) target = $region13
    $region12: #{tpu_custom_call.1} parent=1 // pred_region
      _
    $region13: #{tpu_custom_call.1} parent=1 // pred_fallthru
      _
    // Predicated region
    $region14: #{tpu_custom_call.1} parent=1 // pred_check
      _
    $region15: #{tpu_custom_call.1} parent=1 // pred_check_branch
      %41 = sbr.rel (0) target = $region17
    $region16: #{tpu_custom_call.1} parent=1 // pred_region
      %s43 = ssub.s32 1024, 1024
      %44 = vsyncadd [#allocation6], %s43
      %s45 = sshll.u32 [#allocation7], 4
      %s46 = int_to_ptr.vmem [resolvable:$true] %s45
      %51 = dma.hbm_to_vmem [thread:$0]  %s3, 1024, %s46, [#allocation6], 64, 64, 4
    $region17: #{tpu_custom_call.1} parent=1 // pred_fallthru
      _
    // Predicated region
    $region18: #{tpu_custom_call.1} parent=1 // pred_check
      _
    $region19: #{tpu_custom_call.1} parent=1 // pred_check_branch
      %53 = sbr.rel (0) target = $region21
    $region20: #{tpu_custom_call.1} parent=1 // pred_region
      _
    $region21: #{tpu_custom_call.1} parent=1 // pred_fallthru
      _
    // Predicated region
    $region22: #{tpu_custom_call.1} parent=1 // pred_check
      _
    $region23: #{tpu_custom_call.1} parent=1 // pred_check_branch
      %55 = sbr.rel (0) target = $region25
    $region24: #{tpu_custom_call.1} parent=1 // pred_region
      %s57 = ssub.s32 1024, 1024
      %58 = vsyncadd [#allocation9], %s57
      %s59 = sshll.u32 [#allocation8], 4
      %s60 = int_to_ptr.vmem [resolvable:$true] %s59
      %65 = dma.hbm_to_vmem [thread:$0]  %s5, 1024, %s60, [#allocation9], 64, 64, 4
    $region25: #{tpu_custom_call.1} parent=1 // pred_fallthru
      _
    // Predicated region
    $region26: #{tpu_custom_call.1} parent=1 // pred_check
      _
    $region27: #{tpu_custom_call.1} parent=1 // pred_check_branch
      %67 = sbr.rel (0) target = $region29
    $region28: #{tpu_custom_call.1} parent=1 // pred_region
      _
    $region29: #{tpu_custom_call.1} parent=1 // pred_fallthru
      _
    // Predicated region
    $region30: #{tpu_custom_call.1} parent=1 // pred_check
      _
    $region31: #{tpu_custom_call.1} parent=1 // pred_check_branch
      %69 = sbr.rel (0) target = $region33
    $region32: #{tpu_custom_call.1} parent=1 // pred_region
      %70 = dma.done [#allocation3], 64
    $region33: #{tpu_custom_call.1} parent=1 // pred_fallthru
      _
    // Predicated region
    $region34: #{tpu_custom_call.1} parent=1 // pred_check
      _
    $region35: #{tpu_custom_call.1} parent=1 // pred_check_branch
      %72 = sbr.rel (0) target = $region37
    $region36: #{tpu_custom_call.1} parent=1 // pred_region
      %73 = dma.done [#allocation6], 256
    $region37: #{tpu_custom_call.1} parent=1 // pred_fallthru
      _
    // Predicated region
    $region38: #{tpu_custom_call.1} parent=1 // pred_check
      _
    $region39: #{tpu_custom_call.1} parent=1 // pred_check_branch
      %75 = sbr.rel (0) target = $region41
    $region40: #{tpu_custom_call.1} parent=1 // pred_region
      %76 = dma.done [#allocation6], 1024
    $region41: #{tpu_custom_call.1} parent=1 // pred_fallthru
      _
    // Predicated region
    $region42: #{tpu_custom_call.1} parent=1 // pred_check
      _
    $region43: #{tpu_custom_call.1} parent=1 // pred_check_branch
      %78 = sbr.rel (0) target = $region45
    $region44: #{tpu_custom_call.1} parent=1 // pred_region
      %79 = dma.done [#allocation9], 1024
    $region45: #{tpu_custom_call.1} parent=1 // pred_fallthru
      _
    %v81 = vld [vmem:[#allocation2] sm:$0xf]
    %v82 = vld [vmem:[#allocation5] sm:$0xf]
    %v83 = vld [vmem:[#allocation5 + $0x4] sm:$0xf]
    %v84 = vld [vmem:[#allocation5 + $0x8] sm:$0xf]
    %v85 = vld [vmem:[#allocation5 + $0xc] sm:$0xf]
    %v86 = vld [vmem:[%s2] sm:$0x1]
    %v88 = vlaneseq
    %v89 = vshrl.u32 %v88, 7
    %v90 = vsub.s32 0, %v89
    %v91 = vrot.slane %v86, %v90
    %v97 = vunpack.c.l.b16 %v82
    %v98 = vunpack.c.l.b16 %v83
    %v99 = vunpack.c.l.b16 %v84
    %v100 = vunpack.c.l.b16 %v85
    %v101 = vpack.c.b16 %v98, %v97
    %v102 = vpack.c.b16 %v100, %v99
    %vm105 = vcmask 261120
    %v107 = vsel %vm105, %v81, 0
    %109 = vmatprep.subr.bf16.mxu0 0
    %110 = vmatpush1.bf16.msra.mxu0 %v101
    %111 = vmatprep.subr.bf16.mxu0 0
    %112 = vmatpush1.bf16.msra.mxu0 %v102
    %113 = vmatprep.subr.bf16.mxu0 0
    %114 = vmatpush1.bf16.msra.mxu0 0
    %115 = vmatprep.subr.bf16.mxu0 0
    %116 = vmatpush1.bf16.msra.mxu0 0
    %117 = vmatprep.subr.bf16.mxu0 0
    %118 = vmatpush1.bf16.msra.mxu0 0
    %119 = vmatprep.subr.bf16.mxu0 0
    %120 = vmatpush1.bf16.msra.mxu0 0
    %121 = vmatprep.subr.bf16.mxu0 0
    %122 = vmatpush1.bf16.msra.mxu0 0
    %123 = vmatprep.subr.bf16.mxu0 0
    %124 = vmatpush1.bf16.msra.mxu0 0
    %125 = vmatprep.subr.bf16.mxu0 0
    %126 = vmatpush1.bf16.msra.mxu0 0
    %127 = vmatprep.subr.bf16.mxu0 0
    %128 = vmatpush1.bf16.msra.mxu0 0
    %129 = vmatprep.subr.bf16.mxu0 0
    %130 = vmatpush1.bf16.msra.mxu0 0
    %131 = vmatprep.subr.bf16.mxu0 0
    %132 = vmatpush1.bf16.msra.mxu0 0
    %133 = vmatprep.subr.bf16.mxu0 0
    %134 = vmatpush1.bf16.msra.mxu0 0
    %135 = vmatprep.subr.bf16.mxu0 0
    %136 = vmatpush1.bf16.msra.mxu0 0
    %137 = vmatprep.subr.bf16.mxu0 0
    %138 = vmatpush1.bf16.msra.mxu0 0
    %139 = vmatprep.subr.bf16.mxu0 0
    %140 = vmatpush1.bf16.msra.mxu0 0
    %141 = vmatprep.mubr.bf16.mxu0 0
    %142 = vmatmul.mubr.bf16.gmra.mrb[0].mxu0 %v107
    %v143 = vpop.f32.mrb[0].mxu0
    %v144 = vadd.f32 %v91, %v143
    %v145 = vpop.f32.mrb[0].mxu0
    %v146 = vpop.f32.mrb[0].mxu0
    %v147 = vpop.f32.mrb[0].mxu0
    %148 = vdwg.mxu0
    %v149 = vmax.f32 %v144, 0.0
    %v150 = vpack.c.bf16 %v149, %v149
    %v151 = vld [vmem:[#allocation7] sm:$0xf]
    %v152 = vld [vmem:[#allocation7 + $0x4] sm:$0xf]
    %v153 = vld [vmem:[#allocation7 + $0x8] sm:$0xf]
    %v154 = vld [vmem:[#allocation7 + $0xc] sm:$0xf]
    %v155 = vld [vmem:[#allocation7 + $0x10] sm:$0xf]
    %v156 = vld [vmem:[#allocation7 + $0x14] sm:$0xf]
    %v157 = vld [vmem:[#allocation7 + $0x18] sm:$0xf]
    %v158 = vld [vmem:[#allocation7 + $0x1c] sm:$0xf]
    %v159 = vld [vmem:[#allocation7 + $0x20] sm:$0xf]
    %v160 = vld [vmem:[#allocation7 + $0x24] sm:$0xf]
    %v161 = vld [vmem:[#allocation7 + $0x28] sm:$0xf]
    %v162 = vld [vmem:[#allocation7 + $0x2c] sm:$0xf]
    %v163 = vld [vmem:[#allocation7 + $0x30] sm:$0xf]
    %v164 = vld [vmem:[#allocation7 + $0x34] sm:$0xf]
    %v165 = vld [vmem:[#allocation7 + $0x38] sm:$0xf]
    %v166 = vld [vmem:[#allocation7 + $0x3c] sm:$0xf]
    %v167 = vld [vmem:[%s4] sm:$0x1]
    %v169 = vlaneseq
    %v170 = vshrl.u32 %v169, 7
    %v171 = vsub.s32 0, %v170
    %v172 = vrot.slane %v167, %v171
    %v190 = vunpack.c.l.b16 %v151
    %v191 = vunpack.c.l.b16 %v152
    %v192 = vunpack.c.l.b16 %v153
    %v193 = vunpack.c.l.b16 %v154
    %v194 = vunpack.c.l.b16 %v155
    %v195 = vunpack.c.l.b16 %v156
    %v196 = vunpack.c.l.b16 %v157
    %v197 = vunpack.c.l.b16 %v158
    %v198 = vunpack.c.l.b16 %v159
    %v199 = vunpack.c.l.b16 %v160
    %v200 = vunpack.c.l.b16 %v161
    %v201 = vunpack.c.l.b16 %v162
    %v202 = vunpack.c.l.b16 %v163
    %v203 = vunpack.c.l.b16 %v164
    %v204 = vunpack.c.l.b16 %v165
    %v205 = vunpack.c.l.b16 %v166
    %v206 = vpack.c.b16 %v191, %v190
    %v207 = vpack.c.b16 %v193, %v192
    %v208 = vpack.c.b16 %v195, %v194
    %v209 = vpack.c.b16 %v197, %v196
    %v210 = vpack.c.b16 %v199, %v198
    %v211 = vpack.c.b16 %v201, %v200
    %v212 = vpack.c.b16 %v203, %v202
    %v213 = vpack.c.b16 %v205, %v204
    %222 = vmatprep.subr.bf16.mxu0 0
    %223 = vmatpush1.bf16.msra.mxu0 %v206
    %224 = vmatprep.subr.bf16.mxu0 0
    %225 = vmatpush1.bf16.msra.mxu0 %v207
    %226 = vmatprep.subr.bf16.mxu0 0
    %227 = vmatpush1.bf16.msra.mxu0 %v208
    %228 = vmatprep.subr.bf16.mxu0 0
    %229 = vmatpush1.bf16.msra.mxu0 %v209
    %230 = vmatprep.subr.bf16.mxu0 0
    %231 = vmatpush1.bf16.msra.mxu0 %v210
    %232 = vmatprep.subr.bf16.mxu0 0
    %233 = vmatpush1.bf16.msra.mxu0 %v211
    %234 = vmatprep.subr.bf16.mxu0 0
    %235 = vmatpush1.bf16.msra.mxu0 %v212
    %236 = vmatprep.subr.bf16.mxu0 0
    %237 = vmatpush1.bf16.msra.mxu0 %v213
    %238 = vmatprep.subr.bf16.mxu0 0
    %239 = vmatpush1.bf16.msra.mxu0 0
    %240 = vmatprep.subr.bf16.mxu0 0
    %241 = vmatpush1.bf16.msra.mxu0 0
    %242 = vmatprep.subr.bf16.mxu0 0
    %243 = vmatpush1.bf16.msra.mxu0 0
    %244 = vmatprep.subr.bf16.mxu0 0
    %245 = vmatpush1.bf16.msra.mxu0 0
    %246 = vmatprep.subr.bf16.mxu0 0
    %247 = vmatpush1.bf16.msra.mxu0 0
    %248 = vmatprep.subr.bf16.mxu0 0
    %249 = vmatpush1.bf16.msra.mxu0 0
    %250 = vmatprep.subr.bf16.mxu0 0
    %251 = vmatpush1.bf16.msra.mxu0 0
    %252 = vmatprep.subr.bf16.mxu0 0
    %253 = vmatpush1.bf16.msra.mxu0 0
    %254 = vmatprep.mubr.bf16.mxu0 0
    %255 = vmatmul.mubr.bf16.gmra.mrb[0].mxu0 %v150
    %v256 = vpop.f32.mrb[0].mxu0
    %v257 = vadd.f32 %v172, %v256
    %v258 = vpop.f32.mrb[0].mxu0
    %v259 = vpop.f32.mrb[0].mxu0
    %v260 = vpop.f32.mrb[0].mxu0
    %261 = vdwg.mxu0
    %v262 = vmax.f32 %v257, 0.0
    %v263 = vpack.c.bf16 %v262, %v262
    %v264 = vld [vmem:[#allocation8] sm:$0xf]
    %v265 = vld [vmem:[#allocation8 + $0x4] sm:$0xf]
    %v266 = vld [vmem:[#allocation8 + $0x8] sm:$0xf]
    %v267 = vld [vmem:[#allocation8 + $0xc] sm:$0xf]
    %v268 = vld [vmem:[#allocation8 + $0x10] sm:$0xf]
    %v269 = vld [vmem:[#allocation8 + $0x14] sm:$0xf]
    %v270 = vld [vmem:[#allocation8 + $0x18] sm:$0xf]
    %v271 = vld [vmem:[#allocation8 + $0x1c] sm:$0xf]
    %v272 = vld [vmem:[#allocation8 + $0x20] sm:$0xf]
    %v273 = vld [vmem:[#allocation8 + $0x24] sm:$0xf]
    %v274 = vld [vmem:[#allocation8 + $0x28] sm:$0xf]
    %v275 = vld [vmem:[#allocation8 + $0x2c] sm:$0xf]
    %v276 = vld [vmem:[#allocation8 + $0x30] sm:$0xf]
    %v277 = vld [vmem:[#allocation8 + $0x34] sm:$0xf]
    %v278 = vld [vmem:[#allocation8 + $0x38] sm:$0xf]
    %v279 = vld [vmem:[#allocation8 + $0x3c] sm:$0xf]
    %v280 = vld [vmem:[%s6] sm:$0x1]
    %v282 = vlaneseq
    %v283 = vshrl.u32 %v282, 7
    %v284 = vsub.s32 0, %v283
    %v285 = vrot.slane %v280, %v284
    %v303 = vunpack.c.l.b16 %v264
    %v304 = vunpack.c.l.b16 %v265
    %v305 = vunpack.c.l.b16 %v266
    %v306 = vunpack.c.l.b16 %v267
    %v307 = vunpack.c.l.b16 %v268
    %v308 = vunpack.c.l.b16 %v269
    %v309 = vunpack.c.l.b16 %v270
    %v310 = vunpack.c.l.b16 %v271
    %v311 = vunpack.c.l.b16 %v272
    %v312 = vunpack.c.l.b16 %v273
    %v313 = vunpack.c.l.b16 %v274
    %v314 = vunpack.c.l.b16 %v275
    %v315 = vunpack.c.l.b16 %v276
    %v316 = vunpack.c.l.b16 %v277
    %v317 = vunpack.c.l.b16 %v278
    %v318 = vunpack.c.l.b16 %v279
    %v319 = vpack.c.b16 %v304, %v303
    %v320 = vpack.c.b16 %v306, %v305
    %v321 = vpack.c.b16 %v308, %v307
    %v322 = vpack.c.b16 %v310, %v309
    %v323 = vpack.c.b16 %v312, %v311
    %v324 = vpack.c.b16 %v314, %v313
    %v325 = vpack.c.b16 %v316, %v315
    %v326 = vpack.c.b16 %v318, %v317
    %335 = vmatprep.subr.bf16.mxu0 0
    %336 = vmatpush1.bf16.msra.mxu0 %v319
    %337 = vmatprep.subr.bf16.mxu0 0
    %338 = vmatpush1.bf16.msra.mxu0 %v320
    %339 = vmatprep.subr.bf16.mxu0 0
    %340 = vmatpush1.bf16.msra.mxu0 %v321
    %341 = vmatprep.subr.bf16.mxu0 0
    %342 = vmatpush1.bf16.msra.mxu0 %v322
    %343 = vmatprep.subr.bf16.mxu0 0
    %344 = vmatpush1.bf16.msra.mxu0 %v323
    %345 = vmatprep.subr.bf16.mxu0 0
    %346 = vmatpush1.bf16.msra.mxu0 %v324
    %347 = vmatprep.subr.bf16.mxu0 0
    %348 = vmatpush1.bf16.msra.mxu0 %v325
    %349 = vmatprep.subr.bf16.mxu0 0
    %350 = vmatpush1.bf16.msra.mxu0 %v326
    %351 = vmatprep.subr.bf16.mxu0 0
    %352 = vmatpush1.bf16.msra.mxu0 0
    %353 = vmatprep.subr.bf16.mxu0 0
    %354 = vmatpush1.bf16.msra.mxu0 0
    %355 = vmatprep.subr.bf16.mxu0 0
    %356 = vmatpush1.bf16.msra.mxu0 0
    %357 = vmatprep.subr.bf16.mxu0 0
    %358 = vmatpush1.bf16.msra.mxu0 0
    %359 = vmatprep.subr.bf16.mxu0 0
    %360 = vmatpush1.bf16.msra.mxu0 0
    %361 = vmatprep.subr.bf16.mxu0 0
    %362 = vmatpush1.bf16.msra.mxu0 0
    %363 = vmatprep.subr.bf16.mxu0 0
    %364 = vmatpush1.bf16.msra.mxu0 0
    %365 = vmatprep.subr.bf16.mxu0 0
    %366 = vmatpush1.bf16.msra.mxu0 0
    %367 = vmatprep.mubr.bf16.mxu0 0
    %368 = vmatmul.mubr.bf16.gmra.mrb[0].mxu0 %v263
    %v369 = vpop.f32.mrb[0].mxu0
    %v370 = vadd.f32 %v285, %v369
    %v371 = vpop.f32.mrb[0].mxu0
    %v372 = vpop.f32.mrb[0].mxu0
    %v373 = vpop.f32.mrb[0].mxu0
    %374 = vdwg.mxu0
    %v375 = vpack.c.bf16 %v370, %v370
    %376 = vst [vmem:[#allocation10] sm:$0xf] %v375
    // Predicated region
    $region46: #{tpu_custom_call.1} parent=1 // pred_check
      _
    $region47: #{tpu_custom_call.1} parent=1 // pred_check_branch
      %378 = sbr.rel (0) target = $region49
    $region48: #{tpu_custom_call.1} parent=1 // pred_region
      %s380 = ssub.s32 64, 64
      %381 = vsyncadd [#allocation4], %s380
      %s383 = sshll.u32 [#allocation10], 4
      %s384 = int_to_ptr.vmem [resolvable:$true] %s383
      %386 = dma.vmem_to_hbm [thread:$0]  %s384, 64, %s7, [#allocation4]
    $region49: #{tpu_custom_call.1} parent=1 // pred_fallthru
      _
    // Predicated region
    $region50: #{tpu_custom_call.1} parent=1 // pred_check
      _
    $region51: #{tpu_custom_call.1} parent=1 // pred_check_branch
      %388 = sbr.rel (0) target = $region53
    $region52: #{tpu_custom_call.1} parent=1 // pred_region
      %389 = dma.done [#allocation4], 64
    $region53: #{tpu_custom_call.1} parent=1 // pred_fallthru
      _
    %390 = vsyncpa [#allocation3], 1
    %391 = vsyncpa [#allocation6], 1
    %392 = vsyncpa [#allocation9], 1
    %393 = vsyncpa [#allocation4], 1

// kernel: tpu_custom_call.1
$region0: #{tpu_custom_call.1}
  #allocation0 [shape = 'u32[]', space=smem, size = 0x4, offset = 0x4, fixed_abs, tag = 'smem constant byte address 0x4 - core index']
  #allocation1 [shape = 'u32[144,128]{1,0:T(1,128)}', space=vmem, size = 0x12000, scoped, tag = 'internal scratch']
  %s0 = inlined_call_operand.hbm [shape: bf16[8,32], index: 0, kind: input, shape index: {}]
  %s1 = inlined_call_operand.hbm [shape: bf16[32,128], index: 1, kind: input, shape index: {}]
  %s2 = inlined_call_operand.vmem [shape: f32[1,128], index: 2, kind: input, shape index: {}]
  %s3 = inlined_call_operand.hbm [shape: bf16[128,128], index: 3, kind: input, shape index: {}]
  %s4 = inlined_call_operand.vmem [shape: f32[1,128], index: 4, kind: input, shape index: {}]
  %s5 = inlined_call_operand.hbm [shape: bf16[128,128], index: 5, kind: input, shape index: {}]
  %s6 = inlined_call_operand.vmem [shape: f32[1,128], index: 6, kind: input, shape index: {}]
  %s7 = inlined_call_operand.hbm [shape: bf16[8,128], index: 7, kind: output, shape index: {}]
  %s8 = sld [smem:[#allocation0]]
  $region54: #{tpu_custom_call.1} parent=0
    _
  %s10 = ssub.s32 1, %s8
  %s11 = scalar_select 0, %s10, %s8
  $region1: #{tpu_custom_call.1} parent=0
    #allocation2 [shape = 'u8[2048]{0}', space=vmem, size = 0x800, scoped, tag = 'input window, operand 0, single buffered']
    #allocation3 [shape = 's32[1]{0}', space=sflag, size = 0x4, scoped, tag = 'scoped memory for tpu_custom_call.1']
    #allocation4 [shape = 's32[1]{0}', space=sflag, size = 0x4, scoped, tag = 'scoped memory for tpu_custom_call.1']
    #allocation5 [shape = 'u8[8192]{0}', space=vmem, size = 0x2000, scoped, tag = 'input window, operand 1, single buffered']
    #allocation6 [shape = 's32[1]{0}', space=sflag, size = 0x4, scoped, tag = 'scoped memory for tpu_custom_call.1']
    #allocation7 [shape = 'u8[32768]{0}', space=vmem, size = 0x8000, scoped, tag = 'input window, operand 3, single buffered']
    #allocation8 [shape = 'u8[32768]{0}', space=vmem, size = 0x8000, scoped, tag = 'input window, operand 5, single buffered']
    #allocation9 [shape = 's32[1]{0}', space=sflag, size = 0x4, scoped, tag = 'scoped memory for tpu_custom_call.1']
    #allocation10 [shape = 'u8[2048]{0}', space=vmem, size = 0x800, scoped, tag = 'output window, operand 0, single buffered']
    %12 = vsyncpa [#allocation3], 0
    %13 = vsyncpa [#allocation6], 0
    %14 = vsyncpa [#allocation9], 0
    %15 = vsyncpa [#allocation4], 0
    // Predicated region
    $region2: #{tpu_custom_call.1} parent=1 // pred_check
      _
    $region3: #{tpu_custom_call.1} parent=1 // pred_check_branch
      %17 = sbr.rel (0) target = $region5
    $region4: #{tpu_custom_call.1} parent=1 // pred_region
      %s19 = ssub.s32 64, 64
      %20 = vsyncadd [#allocation3], %s19
      %s22 = sshll.u32 [#allocation2], 4
      %s23 = int_to_ptr.vmem [resolvable:$true] %s22
      %25 = dma.hbm_to_vmem [thread:$0]  %s0, 64, %s23, [#allocation3]
    $region5: #{tpu_custom_call.1} parent=1 // pred_fallthru
      _
    // Predicated region
    $region6: #{tpu_custom_call.1} parent=1 // pred_check
      _
    $region7: #{tpu_custom_call.1} parent=1 // pred_check_branch
      %27 = sbr.rel (0) target = $region9
    $region8: #{tpu_custom_call.1} parent=1 // pred_region
      %s29 = ssub.s32 256, 256
      %30 = vsyncadd [#allocation6], %s29
      %s31 = sshll.u32 [#allocation5], 4
      %s32 = int_to_ptr.vmem [resolvable:$true] %s31
      %37 = dma.hbm_to_vmem [thread:$0]  %s1, 256, %s32, [#allocation6], 64, 64, 4
    $region9: #{tpu_custom_call.1} parent=1 // pred_fallthru
      _
    // Predicated region
    $region10: #{tpu_custom_call.1} parent=1 // pred_check
      _
    $region11: #{tpu_custom_call.1} parent=1 // pred_check_branch
      %39 = sbr.rel (0) target = $region13
    $region12: #{tpu_custom_call.1} parent=1 // pred_region
      _
    $region13: #{tpu_custom_call.1} parent=1 // pred_fallthru
      _
    // Predicated region
    $region14: #{tpu_custom_call.1} parent=1 // pred_check
      _
    $region15: #{tpu_custom_call.1} parent=1 // pred_check_branch
      %41 = sbr.rel (0) target = $region17
    $region16: #{tpu_custom_call.1} parent=1 // pred_region
      %s43 = ssub.s32 1024, 1024
      %44 = vsyncadd [#allocation6], %s43
      %s45 = sshll.u32 [#allocation7], 4
      %s46 = int_to_ptr.vmem [resolvable:$true] %s45
      %51 = dma.hbm_to_vmem [thread:$0]  %s3, 1024, %s46, [#allocation6], 64, 64, 4
    $region17: #{tpu_custom_call.1} parent=1 // pred_fallthru
      _
    // Predicated region
    $region18: #{tpu_custom_call.1} parent=1 // pred_check
      _
    $region19: #{tpu_custom_call.1} parent=1 // pred_check_branch
      %53 = sbr.rel (0) target = $region21
    $region20: #{tpu_custom_call.1} parent=1 // pred_region
      _
    $region21: #{tpu_custom_call.1} parent=1 // pred_fallthru
      _
    // Predicated region
    $region22: #{tpu_custom_call.1} parent=1 // pred_check
      _
    $region23: #{tpu_custom_call.1} parent=1 // pred_check_branch
      %55 = sbr.rel (0) target = $region25
    $region24: #{tpu_custom_call.1} parent=1 // pred_region
      %s57 = ssub.s32 1024, 1024
      %58 = vsyncadd [#allocation9], %s57
      %s59 = sshll.u32 [#allocation8], 4
      %s60 = int_to_ptr.vmem [resolvable:$true] %s59
      %65 = dma.hbm_to_vmem [thread:$0]  %s5, 1024, %s60, [#allocation9], 64, 64, 4
    $region25: #{tpu_custom_call.1} parent=1 // pred_fallthru
      _
    // Predicated region
    $region26: #{tpu_custom_call.1} parent=1 // pred_check
      _
    $region27: #{tpu_custom_call.1} parent=1 // pred_check_branch
      %67 = sbr.rel (0) target = $region29
    $region28: #{tpu_custom_call.1} parent=1 // pred_region
      _
    $region29: #{tpu_custom_call.1} parent=1 // pred_fallthru
      _
    // Predicated region
    $region30: #{tpu_custom_call.1} parent=1 // pred_check
      _
    $region31: #{tpu_custom_call.1} parent=1 // pred_check_branch
      %69 = sbr.rel (0) target = $region33
    $region32: #{tpu_custom_call.1} parent=1 // pred_region
      %70 = dma.done [#allocation3], 64
    $region33: #{tpu_custom_call.1} parent=1 // pred_fallthru
      _
    // Predicated region
    $region34: #{tpu_custom_call.1} parent=1 // pred_check
      _
    $region35: #{tpu_custom_call.1} parent=1 // pred_check_branch
      %72 = sbr.rel (0) target = $region37
    $region36: #{tpu_custom_call.1} parent=1 // pred_region
      %73 = dma.done [#allocation6], 256
    $region37: #{tpu_custom_call.1} parent=1 // pred_fallthru
      _
    // Predicated region
    $region38: #{tpu_custom_call.1} parent=1 // pred_check
      _
    $region39: #{tpu_custom_call.1} parent=1 // pred_check_branch
      %75 = sbr.rel (0) target = $region41
    $region40: #{tpu_custom_call.1} parent=1 // pred_region
      %76 = dma.done [#allocation6], 1024
    $region41: #{tpu_custom_call.1} parent=1 // pred_fallthru
      _
    // Predicated region
    $region42: #{tpu_custom_call.1} parent=1 // pred_check
      _
    $region43: #{tpu_custom_call.1} parent=1 // pred_check_branch
      %78 = sbr.rel (0) target = $region45
    $region44: #{tpu_custom_call.1} parent=1 // pred_region
      %79 = dma.done [#allocation9], 1024
    $region45: #{tpu_custom_call.1} parent=1 // pred_fallthru
      _
    %v81 = vld [vmem:[#allocation2] sm:$0xf]
    %v82 = vld [vmem:[#allocation5] sm:$0xf]
    %v83 = vld [vmem:[#allocation5 + $0x4] sm:$0xf]
    %v84 = vld [vmem:[#allocation5 + $0x8] sm:$0xf]
    %v85 = vld [vmem:[#allocation5 + $0xc] sm:$0xf]
    %v86 = vld [vmem:[%s2] sm:$0x1]
    %v88 = vlaneseq
    %v89 = vshrl.u32 %v88, 7
    %v90 = vsub.s32 0, %v89
    %v91 = vrot.slane %v86, %v90
    %v97 = vunpack.c.l.b16 %v82
    %v98 = vunpack.c.l.b16 %v83
    %v99 = vunpack.c.l.b16 %v84
    %v100 = vunpack.c.l.b16 %v85
    %v101 = vpack.c.b16 %v98, %v97
    %v102 = vpack.c.b16 %v100, %v99
    %vm105 = vcmask 261120
    %v107 = vsel %vm105, %v81, 0
    %109 = vmatprep.subr.bf16.mxu0 0
    %110 = vmatpush1.bf16.msra.mxu0 %v101
    %111 = vmatprep.subr.bf16.mxu0 0
    %112 = vmatpush1.bf16.msra.mxu0 %v102
    %113 = vmatprep.subr.bf16.mxu0 0
    %114 = vmatpush1.bf16.msra.mxu0 0
    %115 = vmatprep.subr.bf16.mxu0 0
    %116 = vmatpush1.bf16.msra.mxu0 0
    %117 = vmatprep.subr.bf16.mxu0 0
    %118 = vmatpush1.bf16.msra.mxu0 0
    %119 = vmatprep.subr.bf16.mxu0 0
    %120 = vmatpush1.bf16.msra.mxu0 0
    %121 = vmatprep.subr.bf16.mxu0 0
    %122 = vmatpush1.bf16.msra.mxu0 0
    %123 = vmatprep.subr.bf16.mxu0 0
    %124 = vmatpush1.bf16.msra.mxu0 0
    %125 = vmatprep.subr.bf16.mxu0 0
    %126 = vmatpush1.bf16.msra.mxu0 0
    %127 = vmatprep.subr.bf16.mxu0 0
    %128 = vmatpush1.bf16.msra.mxu0 0
    %129 = vmatprep.subr.bf16.mxu0 0
    %130 = vmatpush1.bf16.msra.mxu0 0
    %131 = vmatprep.subr.bf16.mxu0 0
    %132 = vmatpush1.bf16.msra.mxu0 0
    %133 = vmatprep.subr.bf16.mxu0 0
    %134 = vmatpush1.bf16.msra.mxu0 0
    %135 = vmatprep.subr.bf16.mxu0 0
    %136 = vmatpush1.bf16.msra.mxu0 0
    %137 = vmatprep.subr.bf16.mxu0 0
    %138 = vmatpush1.bf16.msra.mxu0 0
    %139 = vmatprep.subr.bf16.mxu0 0
    %140 = vmatpush1.bf16.msra.mxu0 0
    %141 = vmatprep.mubr.bf16.mxu0 0
    %142 = vmatmul.mubr.bf16.gmra.mrb[0].mxu0 %v107
    %v143 = vpop.f32.mrb[0].mxu0
    %v144 = vadd.f32 %v91, %v143
    %v145 = vpop.f32.mrb[0].mxu0
    %v146 = vpop.f32.mrb[0].mxu0
    %v147 = vpop.f32.mrb[0].mxu0
    %148 = vdwg.mxu0
    %v149 = vmax.f32 %v144, 0.0
    %v150 = vpack.c.bf16 %v149, %v149
    %v151 = vld [vmem:[#allocation7] sm:$0xf]
    %v152 = vld [vmem:[#allocation7 + $0x4] sm:$0xf]
    %v153 = vld [vmem:[#allocation7 + $0x8] sm:$0xf]
    %v154 = vld [vmem:[#allocation7 + $0xc] sm:$0xf]
    %v155 = vld [vmem:[#allocation7 + $0x10] sm:$0xf]
    %v156 = vld [vmem:[#allocation7 + $0x14] sm:$0xf]
    %v157 = vld [vmem:[#allocation7 + $0x18] sm:$0xf]
    %v158 = vld [vmem:[#allocation7 + $0x1c] sm:$0xf]
    %v159 = vld [vmem:[#allocation7 + $0x20] sm:$0xf]
    %v160 = vld [vmem:[#allocation7 + $0x24] sm:$0xf]
    %v161 = vld [vmem:[#allocation7 + $0x28] sm:$0xf]
    %v162 = vld [vmem:[#allocation7 + $0x2c] sm:$0xf]
    %v163 = vld [vmem:[#allocation7 + $0x30] sm:$0xf]
    %v164 = vld [vmem:[#allocation7 + $0x34] sm:$0xf]
    %v165 = vld [vmem:[#allocation7 + $0x38] sm:$0xf]
    %v166 = vld [vmem:[#allocation7 + $0x3c] sm:$0xf]
    %v167 = vld [vmem:[%s4] sm:$0x1]
    %v169 = vlaneseq
    %v170 = vshrl.u32 %v169, 7
    %v171 = vsub.s32 0, %v170
    %v172 = vrot.slane %v167, %v171
    %v190 = vunpack.c.l.b16 %v151
    %v191 = vunpack.c.l.b16 %v152
    %v192 = vunpack.c.l.b16 %v153
    %v193 = vunpack.c.l.b16 %v154
    %v194 = vunpack.c.l.b16 %v155
    %v195 = vunpack.c.l.b16 %v156
    %v196 = vunpack.c.l.b16 %v157
    %v197 = vunpack.c.l.b16 %v158
    %v198 = vunpack.c.l.b16 %v159
    %v199 = vunpack.c.l.b16 %v160
    %v200 = vunpack.c.l.b16 %v161
    %v201 = vunpack.c.l.b16 %v162
    %v202 = vunpack.c.l.b16 %v163
    %v203 = vunpack.c.l.b16 %v164
    %v204 = vunpack.c.l.b16 %v165
    %v205 = vunpack.c.l.b16 %v166
    %v206 = vpack.c.b16 %v191, %v190
    %v207 = vpack.c.b16 %v193, %v192
    %v208 = vpack.c.b16 %v195, %v194
    %v209 = vpack.c.b16 %v197, %v196
    %v210 = vpack.c.b16 %v199, %v198
    %v211 = vpack.c.b16 %v201, %v200
    %v212 = vpack.c.b16 %v203, %v202
    %v213 = vpack.c.b16 %v205, %v204
    %222 = vmatprep.subr.bf16.mxu0 0
    %223 = vmatpush1.bf16.msra.mxu0 %v206
    %224 = vmatprep.subr.bf16.mxu0 0
    %225 = vmatpush1.bf16.msra.mxu0 %v207
    %226 = vmatprep.subr.bf16.mxu0 0
    %227 = vmatpush1.bf16.msra.mxu0 %v208
    %228 = vmatprep.subr.bf16.mxu0 0
    %229 = vmatpush1.bf16.msra.mxu0 %v209
    %230 = vmatprep.subr.bf16.mxu0 0
    %231 = vmatpush1.bf16.msra.mxu0 %v210
    %232 = vmatprep.subr.bf16.mxu0 0
    %233 = vmatpush1.bf16.msra.mxu0 %v211
    %234 = vmatprep.subr.bf16.mxu0 0
    %235 = vmatpush1.bf16.msra.mxu0 %v212
    %236 = vmatprep.subr.bf16.mxu0 0
    %237 = vmatpush1.bf16.msra.mxu0 %v213
    %238 = vmatprep.subr.bf16.mxu0 0
    %239 = vmatpush1.bf16.msra.mxu0 0
    %240 = vmatprep.subr.bf16.mxu0 0
    %241 = vmatpush1.bf16.msra.mxu0 0
    %242 = vmatprep.subr.bf16.mxu0 0
    %243 = vmatpush1.bf16.msra.mxu0 0
    %244 = vmatprep.subr.bf16.mxu0 0
    %245 = vmatpush1.bf16.msra.mxu0 0
    %246 = vmatprep.subr.bf16.mxu0 0
    %247 = vmatpush1.bf16.msra.mxu0 0
    %248 = vmatprep.subr.bf16.mxu0 0
    %249 = vmatpush1.bf16.msra.mxu0 0
    %250 = vmatprep.subr.bf16.mxu0 0
    %251 = vmatpush1.bf16.msra.mxu0 0
    %252 = vmatprep.subr.bf16.mxu0 0
    %253 = vmatpush1.bf16.msra.mxu0 0
    %254 = vmatprep.mubr.bf16.mxu0 0
    %255 = vmatmul.mubr.bf16.gmra.mrb[0].mxu0 %v150
    %v256 = vpop.f32.mrb[0].mxu0
    %v257 = vadd.f32 %v172, %v256
    %v258 = vpop.f32.mrb[0].mxu0
    %v259 = vpop.f32.mrb[0].mxu0
    %v260 = vpop.f32.mrb[0].mxu0
    %261 = vdwg.mxu0
    %v262 = vmax.f32 %v257, 0.0
    %v263 = vpack.c.bf16 %v262, %v262
    %v264 = vld [vmem:[#allocation8] sm:$0xf]
    %v265 = vld [vmem:[#allocation8 + $0x4] sm:$0xf]
    %v266 = vld [vmem:[#allocation8 + $0x8] sm:$0xf]
    %v267 = vld [vmem:[#allocation8 + $0xc] sm:$0xf]
    %v268 = vld [vmem:[#allocation8 + $0x10] sm:$0xf]
    %v269 = vld [vmem:[#allocation8 + $0x14] sm:$0xf]
    %v270 = vld [vmem:[#allocation8 + $0x18] sm:$0xf]
    %v271 = vld [vmem:[#allocation8 + $0x1c] sm:$0xf]
    %v272 = vld [vmem:[#allocation8 + $0x20] sm:$0xf]
    %v273 = vld [vmem:[#allocation8 + $0x24] sm:$0xf]
    %v274 = vld [vmem:[#allocation8 + $0x28] sm:$0xf]
    %v275 = vld [vmem:[#allocation8 + $0x2c] sm:$0xf]
    %v276 = vld [vmem:[#allocation8 + $0x30] sm:$0xf]
    %v277 = vld [vmem:[#allocation8 + $0x34] sm:$0xf]
    %v278 = vld [vmem:[#allocation8 + $0x38] sm:$0xf]
    %v279 = vld [vmem:[#allocation8 + $0x3c] sm:$0xf]
    %v280 = vld [vmem:[%s6] sm:$0x1]
    %v282 = vlaneseq
    %v283 = vshrl.u32 %v282, 7
    %v284 = vsub.s32 0, %v283
    %v285 = vrot.slane %v280, %v284
    %v303 = vunpack.c.l.b16 %v264
    %v304 = vunpack.c.l.b16 %v265
    %v305 = vunpack.c.l.b16 %v266
    %v306 = vunpack.c.l.b16 %v267
    %v307 = vunpack.c.l.b16 %v268
    %v308 = vunpack.c.l.b16 %v269
    %v309 = vunpack.c.l.b16 %v270
    %v310 = vunpack.c.l.b16 %v271
    %v311 = vunpack.c.l.b16 %v272
    %v312 = vunpack.c.l.b16 %v273
    %v313 = vunpack.c.l.b16 %v274
    %v314 = vunpack.c.l.b16 %v275
    %v315 = vunpack.c.l.b16 %v276
    %v316 = vunpack.c.l.b16 %v277
    %v317 = vunpack.c.l.b16 %v278
    %v318 = vunpack.c.l.b16 %v279
    %v319 = vpack.c.b16 %v304, %v303
    %v320 = vpack.c.b16 %v306, %v305
    %v321 = vpack.c.b16 %v308, %v307
    %v322 = vpack.c.b16 %v310, %v309
    %v323 = vpack.c.b16 %v312, %v311
    %v324 = vpack.c.b16 %v314, %v313
    %v325 = vpack.c.b16 %v316, %v315
    %v326 = vpack.c.b16 %v318, %v317
    %335 = vmatprep.subr.bf16.mxu0 0
    %336 = vmatpush1.bf16.msra.mxu0 %v319
    %337 = vmatprep.subr.bf16.mxu0 0
    %338 = vmatpush1.bf16.msra.mxu0 %v320
    %339 = vmatprep.subr.bf16.mxu0 0
    %340 = vmatpush1.bf16.msra.mxu0 %v321
    %341 = vmatprep.subr.bf16.mxu0 0
    %342 = vmatpush1.bf16.msra.mxu0 %v322
    %343 = vmatprep.subr.bf16.mxu0 0
    %344 = vmatpush1.bf16.msra.mxu0 %v323
    %345 = vmatprep.subr.bf16.mxu0 0
    %346 = vmatpush1.bf16.msra.mxu0 %v324
    %347 = vmatprep.subr.bf16.mxu0 0
    %348 = vmatpush1.bf16.msra.mxu0 %v325
    %349 = vmatprep.subr.bf16.mxu0 0
    %350 = vmatpush1.bf16.msra.mxu0 %v326
    %351 = vmatprep.subr.bf16.mxu0 0
    %352 = vmatpush1.bf16.msra.mxu0 0
    %353 = vmatprep.subr.bf16.mxu0 0
    %354 = vmatpush1.bf16.msra.mxu0 0
    %355 = vmatprep.subr.bf16.mxu0 0
    %356 = vmatpush1.bf16.msra.mxu0 0
    %357 = vmatprep.subr.bf16.mxu0 0
    %358 = vmatpush1.bf16.msra.mxu0 0
    %359 = vmatprep.subr.bf16.mxu0 0
    %360 = vmatpush1.bf16.msra.mxu0 0
    %361 = vmatprep.subr.bf16.mxu0 0
    %362 = vmatpush1.bf16.msra.mxu0 0
    %363 = vmatprep.subr.bf16.mxu0 0
    %364 = vmatpush1.bf16.msra.mxu0 0
    %365 = vmatprep.subr.bf16.mxu0 0
    %366 = vmatpush1.bf16.msra.mxu0 0
    %367 = vmatprep.mubr.bf16.mxu0 0
    %368 = vmatmul.mubr.bf16.gmra.mrb[0].mxu0 %v263
    %v369 = vpop.f32.mrb[0].mxu0
    %v370 = vadd.f32 %v285, %v369
    %v371 = vpop.f32.mrb[0].mxu0
    %v372 = vpop.f32.mrb[0].mxu0
    %v373 = vpop.f32.mrb[0].mxu0
    %374 = vdwg.mxu0
    %v375 = vpack.c.bf16 %v370, %v370
    %376 = vst [vmem:[#allocation10] sm:$0xf] %v375
    // Predicated region
    $region46: #{tpu_custom_call.1} parent=1 // pred_check
      _
    $region47: #{tpu_custom_call.1} parent=1 // pred_check_branch
      %378 = sbr.rel (0) target = $region49
    $region48: #{tpu_custom_call.1} parent=1 // pred_region
      %s380 = ssub.s32 64, 64
      %381 = vsyncadd [#allocation4], %s380
      %s383 = sshll.u32 [#allocation10], 4
      %s384 = int_to_ptr.vmem [resolvable:$true] %s383
      %386 = dma.vmem_to_hbm [thread:$0]  %s384, 64, %s7, [#allocation4]
    $region49: #{tpu_custom_call.1} parent=1 // pred_fallthru
      _
    // Predicated region
    $region50: #{tpu_custom_call.1} parent=1 // pred_check
      _
    $region51: #{tpu_custom_call.1} parent=1 // pred_check_branch
      %388 = sbr.rel (0) target = $region53
    $region52: #{tpu_custom_call.1} parent=1 // pred_region
      %389 = dma.done [#allocation4], 64
    $region53: #{tpu_custom_call.1} parent=1 // pred_fallthru
      _
    %390 = vsyncpa [#allocation3], 1
    %391 = vsyncpa [#allocation6], 1
    %392 = vsyncpa [#allocation9], 1
    %393 = vsyncpa [#allocation4], 1

</llo_original>
